<compile_context>
chip_gen: v7x
topology: tpu7x:2x2x1
jax: 0.10.0
libtpu: 0.0.40
codegen_flags: <defaults>
</compile_context>

<pallas_src>
import functools

import jax
import jax.numpy as jnp
from jax.experimental import pallas as pl
from jax.experimental.pallas import tpu as pltpu

EPS = 1e-05

# Target ~4 MiB of f32 working set per (block_rows, D) tile (dtype-independent,
# since the kernel upcasts to f32).  Big enough to amortize the ~0.35us
# per-grid-step overhead on every generation including v7x's faster HBM; small
# enough that double buffers + f32 temporaries stay well inside the explicit
# VMEM budget we set below.
_TARGET_TILE_BYTES_F32 = 4 << 20


def _cdiv(a: int, b: int) -> int:
    return (a + b - 1) // b


def _sublane_pack(dtype) -> int:
    # Sub-32-bit dtypes pack along sublanes: 8 rows for 4B, 16 for 2B, 32 for 1B.
    itemsize = jnp.dtype(dtype).itemsize
    return max(8, 32 // itemsize)


def _pick_block_rows(rows: int, d: int, dtype) -> int:
    """Pick a sublane-aligned row-tile that divides `rows` nearly evenly."""
    pack = _sublane_pack(dtype)
    if rows <= pack:
        # Single full-extent block (block_shape == full array dims is allowed).
        return rows
    target = max(pack, _TARGET_TILE_BYTES_F32 // max(1, d * 4))
    target = max(pack, (target // pack) * pack)
    nblocks = _cdiv(rows, target)
    # v7x megacore: guarantee >= 2 (and an even number of) grid steps so both
    # TensorCores get balanced work.  Harmless on v5e/v6e.
    nblocks = max(nblocks, 2)
    if nblocks % 2:
        nblocks += 1
    block_rows = _cdiv(rows, nblocks)
    block_rows = _cdiv(block_rows, pack) * pack
    return int(block_rows)


def _rmsnorm_kernel(x_ref, scale_ref, o_ref, *, inv_d: float, approx: bool):
    # x_ref: (block_rows, D) tile in VMEM; scale_ref: (1, D); o_ref like x_ref.
    # Phase 1: sum of squares over the lane axis (folded mean as sum * 1/D).
    x32 = x_ref[...].astype(jnp.float32)
    ms = jnp.sum(x32 * x32, axis=-1, keepdims=True) * inv_d       # (block_rows, 1)
    # NOTE: eps is added OUTSIDE the sqrt, exactly as the PyTorch module does.
    # Per-row reciprocal + broadcast multiply instead of a per-element divide.
    inv = pl.reciprocal(jnp.sqrt(ms) + EPS, approx=approx)         # (block_rows, 1)
    s = scale_ref[...].astype(jnp.float32)                         # (1, D)
    # Phase 2: re-read x for the normalize/scale store so the f32 copy above
    # does not have to stay live across both phases (lower peak VMEM).
    o_ref[...] = ((x_ref[...].astype(jnp.float32) * inv) * s).astype(o_ref.dtype)


def rmsnorm(x, scale, *, block_rows=None, approx_reciprocal=False):
    """x: [..., emb_dim], scale: [emb_dim]. Returns same shape/dtype as x."""
    orig_shape = x.shape
    D = orig_shape[-1]
    x2d = x.reshape(-1, D)
    R = x2d.shape[0]

    if block_rows is None:
        block_rows = _pick_block_rows(R, D, x.dtype)
    block_rows = int(min(block_rows, max(R, 1)))

    grid_rows = _cdiv(R, block_rows)
    scale2d = scale.reshape(1, D)

    itemsize = jnp.dtype(x.dtype).itemsize
    cost = pl.CostEstimate(
        flops=3 * R * D,
        transcendentals=R,
        bytes_accessed=2 * R * D * itemsize + D * jnp.dtype(scale.dtype).itemsize,
    )

    # Explicit VMEM budget: 2x input dbuf + 2x output dbuf + ~3 f32 tiles of
    # intermediates + slack.  Keeps us safe under v7x's 64 MiB physical per TC
    # while allowing tiles larger than the v5e/v6e/v7x scoped defaults.
    in_tile = block_rows * D * itemsize
    f32_tile = block_rows * D * 4
    vmem_limit = 4 * in_tile + 3 * f32_tile + (2 << 20)
    vmem_limit = int(min(max(vmem_limit, 24 << 20), 48 << 20))

    kernel = functools.partial(
        _rmsnorm_kernel, inv_d=1.0 / D, approx=approx_reciprocal
    )

    # TODO(synk): if D is ever not a multiple of 128, consider padding the lane
    # dim in the wrapper to keep output stores unmasked (real LLM hidden sizes
    # already are multiples of 128, and a full-extent lane block stays correct).
    out = pl.pallas_call(
        kernel,
        out_shape=jax.ShapeDtypeStruct((R, D), x.dtype),
        grid_spec=pltpu.PrefetchScalarGridSpec(
            num_scalar_prefetch=0,
            grid=(grid_rows,),
            in_specs=[
                pl.BlockSpec((block_rows, D), lambda i: (i, 0)),
                pl.BlockSpec((1, D), lambda i: (0, 0)),
            ],
            out_specs=pl.BlockSpec((block_rows, D), lambda i: (i, 0)),
        ),
        compiler_params=pltpu.CompilerParams(
            # Row tiles are independent -> shard across TensorCores (v7x megacore).
            dimension_semantics=("parallel",),
            vmem_limit_bytes=vmem_limit,
        ),
        cost_estimate=cost,
    )(x2d, scale2d)

    return out.reshape(orig_shape)


def _reference(x, scale):
    xf = x.astype(jnp.float32)
    rms = jnp.sqrt(jnp.mean(xf * xf, axis=-1, keepdims=True))
    return (scale.astype(jnp.float32) * (xf / (rms + EPS))).astype(x.dtype)


if __name__ == "__main__":
    key = jax.random.PRNGKey(0)

    # Test 1: lane-aligned f32, rows divide evenly into the (>=2-step) grid.
    batch, seq, emb_dim = 2, 8, 128
    k1, k2 = jax.random.split(key)
    x = jax.random.normal(k1, (batch, seq, emb_dim), dtype=jnp.float32)
    scale = jnp.ones((emb_dim,), dtype=jnp.float32)  # nn.Parameter(torch.ones(emb_dim))
    y = rmsnorm(x, scale)
    jax.block_until_ready(y)
    ref = _reference(x, scale)
    assert y.shape == x.shape and y.dtype == x.dtype
    assert jnp.allclose(y, ref, atol=1e-5, rtol=1e-5), "f32 mismatch vs reference"

    # Test 2: ragged row count (3*7=21 rows) exercises the partial boundary
    # block (no wrapper-side pad/slice), with a non-trivial scale.
    x2 = jax.random.normal(k2, (3, 7, emb_dim), dtype=jnp.float32)
    scale2 = 0.5 + jax.random.uniform(k2, (emb_dim,), dtype=jnp.float32)
    y2 = rmsnorm(x2, scale2)
    jax.block_until_ready(y2)
    ref2 = _reference(x2, scale2)
    assert jnp.allclose(y2, ref2, atol=1e-5, rtol=1e-5), "ragged f32 mismatch"

    # Test 3: bf16 input/output (f32 accumulation inside the kernel).
    xb = x2.astype(jnp.bfloat16)
    yb = rmsnorm(xb, scale2)
    jax.block_until_ready(yb)
    refb = _reference(xb, scale2)
    assert yb.dtype == jnp.bfloat16
    assert jnp.allclose(
        yb.astype(jnp.float32), refb.astype(jnp.float32), atol=2e-2, rtol=2e-2
    ), "bf16 mismatch vs reference"

    print("KERNEL_OK")
</pallas_src>

<mosaic_0001>
module attributes {stable_mosaic.version = 11 : i64} {
  func.func @_rmsnorm_kernel(%arg0: i32, %arg1: memref<8x128xf32, #tpu.memory_space<vmem>>, %arg2: memref<1x128xf32, #tpu.memory_space<vmem>>, %arg3: memref<8x128xf32, #tpu.memory_space<vmem>>) attributes {dimension_semantics = [#tpu.dimension_semantics<parallel>], iteration_bounds = array<i64: 2>, scalar_prefetch = 0 : i64, scratch_operands = 0 : i64, tpu.core_type = #tpu.core_type<tc>, window_params = [{transform_indices = @transform_0, window_bounds = array<i64: 8, 128>}, {pipeline_mode = #tpu.pipeline_mode<synchronous>, transform_indices = @transform_1, window_bounds = array<i64: 1, 128>}, {transform_indices = @transform_2, window_bounds = array<i64: 8, 128>}]} {
    %c0 = arith.constant 0 : index
    %c0_0 = arith.constant 0 : index
    %0 = vector.load %arg1[%c0, %c0_0] : memref<8x128xf32, #tpu.memory_space<vmem>>, vector<8x128xf32>
    %1 = arith.mulf %0, %0 : vector<8x128xf32>
    %cst = arith.constant dense<0.000000e+00> : vector<8xf32>
    %2 = vector.multi_reduction <add>, %1, %cst [1] : vector<8x128xf32> to vector<8xf32>
    %3 = vector.shape_cast %2 : vector<8xf32> to vector<8x1xf32>
    %cst_1 = arith.constant 7.812500e-03 : f32
    %4 = vector.broadcast %cst_1 : f32 to vector<8x1xf32>
    %5 = arith.mulf %3, %4 : vector<8x1xf32>
    %6 = math.sqrt %5 : vector<8x1xf32>
    %cst_2 = arith.constant 9.99999974E-6 : f32
    %7 = vector.broadcast %cst_2 : f32 to vector<8x1xf32>
    %8 = arith.addf %6, %7 : vector<8x1xf32>
    %9 = tpu.reciprocal %8 : vector<8x1xf32> -> vector<8x1xf32>
    %c0_3 = arith.constant 0 : index
    %c0_4 = arith.constant 0 : index
    %10 = vector.load %arg2[%c0_3, %c0_4] : memref<1x128xf32, #tpu.memory_space<vmem>>, vector<1x128xf32>
    %c0_5 = arith.constant 0 : index
    %c0_6 = arith.constant 0 : index
    %11 = vector.load %arg1[%c0_5, %c0_6] : memref<8x128xf32, #tpu.memory_space<vmem>>, vector<8x128xf32>
    %12 = vector.broadcast %9 : vector<8x1xf32> to vector<8x128xf32>
    %13 = arith.mulf %11, %12 : vector<8x128xf32>
    %14 = vector.broadcast %10 : vector<1x128xf32> to vector<8x128xf32>
    %15 = arith.mulf %13, %14 : vector<8x128xf32>
    %c0_7 = arith.constant 0 : index
    %c0_8 = arith.constant 0 : index
    %16 = vector.load %arg3[%c0_7, %c0_8] : memref<8x128xf32, #tpu.memory_space<vmem>>, vector<8x128xf32>
    tpu.vector_store %arg3[%c0_7, %c0_8], %15 {strides = array<i32>} : memref<8x128xf32, #tpu.memory_space<vmem>>, vector<8x128xf32>,
    return
  }
  func.func @transform_0(%arg0: i32) -> (i32, i32) {
    %c0_i32 = arith.constant 0 : i32
    %c0_i32_0 = arith.constant 0 : i32
    return %arg0, %c0_i32 : i32, i32
  }
  func.func @transform_1(%arg0: i32) -> (i32, i32) {
    %c0_i32 = arith.constant 0 : i32
    %c0_i32_0 = arith.constant 0 : i32
    %c0_i32_1 = arith.constant 0 : i32
    return %c0_i32, %c0_i32_0 : i32, i32
  }
  func.func @transform_2(%arg0: i32) -> (i32, i32) {
    %c0_i32 = arith.constant 0 : i32
    %c0_i32_0 = arith.constant 0 : i32
    return %arg0, %c0_i32 : i32, i32
  }
}

</mosaic_0001>

<llo_original>
// kernel: tpu_custom_call.1
$region0: #{tpu_custom_call.1}
  #allocation0 [shape = 'u32[]', space=smem, size = 0x4, offset = 0x4, fixed_abs, tag = 'smem constant byte address 0x4 - core index']
  #allocation1 [shape = 'u32[144,128]{1,0:T(1,128)}', space=vmem, size = 0x12000, scoped, tag = 'internal scratch']
  %s0 = inlined_call_operand.hbm [shape: f32[16,128], index: 0, kind: input, shape index: {}]
  %s1 = inlined_call_operand.vmem [shape: f32[1,128], index: 1, kind: input, shape index: {}]
  %s2 = inlined_call_operand.hbm [shape: f32[16,128], index: 2, kind: output, shape index: {}]
  %s3 = sld [smem:[#allocation0]]
  $region45: #{tpu_custom_call.1} parent=0
    _
  %s5 = ssub.s32 1, %s3
  %s6 = scalar_select 0, %s5, %s3
  $region1: #{tpu_custom_call.1} parent=0
    #allocation2 [shape = 'u8[8192]{0}', space=vmem, size = 0x2000, scoped, tag = 'input window, operand 0']
    #allocation3 [shape = 's32[2]{0}', space=sflag, size = 0x8, scoped, tag = 'scoped memory for tpu_custom_call.1']
    #allocation4 [shape = 's32[2]{0}', space=sflag, size = 0x8, scoped, tag = 'scoped memory for tpu_custom_call.1']
    #allocation5 [shape = 'u8[8192]{0}', space=vmem, size = 0x2000, scoped, tag = 'output window, operand 0']
    %7 = vsyncpa [#allocation3], 0
    %s8 = scalar_lea.sflag [#allocation3], 1
    %9 = vsyncpa %s8, 0
    %10 = vsyncpa [#allocation4], 0
    %s11 = scalar_lea.sflag [#allocation4], 1
    %12 = vsyncpa %s11, 0
    loop: start=0, step=1, limit=4
    $region2: #{tpu_custom_call.1} parent=1 // loop_pre_header
      _
    $region3: #{tpu_custom_call.1} parent=1 // loop_header
      %s14 = sphi 0, %s18
      %p15 = scmp.ge.s32.totalorder %s14, 4
      %s24 = sphi 0, %s26
      %s27 = sphi 0, %s24
      %s28 = sphi 0, %s27
      %s44 = sphi 0, %s28
      %s48 = sphi 0, %s48
      %s50 = sphi 0, %s48
      %s51 = sphi 0, %s50
      %s65 = sphi 0, %s51
      %s71 = sphi 0, %s73
      %s74 = sphi 0, %s71
      %s75 = sphi 0, %s74
      %s91 = sphi 0, %s75
    $region4: #{tpu_custom_call.1} parent=1 // loop_header_branch
      %17 = sbr.rel (%p15) target = $region8
    $region5: #{tpu_custom_call.1} parent=1 // loop_body
      %s19 = ssub.s32 %s14, 1
      %s20 = ssub.s32 %s14, 2
      %s21 = sadd.s32 %s14, 1
      %s22 = ssub.s32 %s14, %s21
      %p23 = scmp.eq.s32.totalorder %s22, 0
      %s25 = sadd.s32 %s24, 1
      %s26 = scalar_select %p23, %s24, %s25
      %p29 = pneg %p23
      %p30 = scmp.eq.s32.totalorder %s14, 1
      %p31 = por %p29, %p30
      %p32 = scmp.ne.s32.totalorder %s24, %s27
      %p33 = scmp.eq.s32.totalorder %s14, 0
      %p34 = por %p32, %p33
      %p35 = scmp.ne.s32.totalorder %s24, %s27
      %p36 = scmp.eq.s32.totalorder %s19, 1
      %p37 = por %p35, %p36
      %p38 = scmp.ne.s32.totalorder %s27, %s28
      %p39 = scmp.eq.s32.totalorder %s19, 0
      %p40 = por %p38, %p39
      %p41 = scmp.ne.s32.totalorder %s27, %s28
      %p42 = scmp.eq.s32.totalorder %s20, 1
      %p43 = por %p41, %p42
      %p45 = scmp.ne.s32.totalorder %s28, %s44
      %p46 = scmp.eq.s32.totalorder %s20, 0
      %p47 = por %p45, %p46
      %s49 = sadd.s32 %s48, 1
      %p52 = scmp.eq.s32.totalorder %s14, 1
      %p53 = scmp.ne.s32.totalorder %s48, %s50
      %p54 = scmp.eq.s32.totalorder %s14, 0
      %p55 = por %p53, %p54
      %p56 = scmp.ne.s32.totalorder %s48, %s50
      %p57 = scmp.eq.s32.totalorder %s19, 1
      %p58 = por %p56, %p57
      %p59 = scmp.ne.s32.totalorder %s50, %s51
      %p60 = scmp.eq.s32.totalorder %s19, 0
      %p61 = por %p59, %p60
      %p62 = scmp.ne.s32.totalorder %s50, %s51
      %p63 = scmp.eq.s32.totalorder %s20, 1
      %p64 = por %p62, %p63
      %p66 = scmp.ne.s32.totalorder %s51, %s65
      %p67 = scmp.eq.s32.totalorder %s20, 0
      %p68 = por %p66, %p67
      %s69 = ssub.s32 %s14, %s21
      %p70 = scmp.eq.s32.totalorder %s69, 0
      %s72 = sadd.s32 %s71, 1
      %s73 = scalar_select %p70, %s71, %s72
      %p76 = pneg %p70
      %p77 = scmp.eq.s32.totalorder %s14, 1
      %p78 = por %p76, %p77
      %p79 = scmp.ne.s32.totalorder %s71, %s74
      %p80 = scmp.eq.s32.totalorder %s14, 0
      %p81 = por %p79, %p80
      %p82 = scmp.ne.s32.totalorder %s71, %s74
      %p83 = scmp.eq.s32.totalorder %s19, 1
      %p84 = por %p82, %p83
      %p85 = scmp.ne.s32.totalorder %s74, %s75
      %p86 = scmp.eq.s32.totalorder %s19, 0
      %p87 = por %p85, %p86
      %p88 = scmp.ne.s32.totalorder %s74, %s75
      %p89 = scmp.eq.s32.totalorder %s20, 1
      %p90 = por %p88, %p89
      %p92 = scmp.ne.s32.totalorder %s75, %s91
      %p93 = scmp.eq.s32.totalorder %s20, 0
      %p94 = por %p92, %p93
      %p95 = scmp.le.s32.totalorder 1, %s14
      %p96 = scmp.lt.s32.totalorder %s14, 3
      %p97 = pnand %p95, %p96
      %p98 = pneg %p97
      // Predicated region
      $region9: #{tpu_custom_call.1} parent=5 // pred_check
        _
      $region10: #{tpu_custom_call.1} parent=5 // pred_check_branch
        %100 = sbr.rel (%p97) target = $region12
      $region11: #{tpu_custom_call.1} parent=5 // pred_region
        %s101 = ssub.s32 %s14, 1
        // Predicated region
        $region13: #{tpu_custom_call.1} parent=11 // pred_check
          %p102 = pneg %p61
        $region14: #{tpu_custom_call.1} parent=11 // pred_check_branch
          %104 = sbr.rel (%p102) target = $region16
        $region15: #{tpu_custom_call.1} parent=11 // pred_region
          _
        $region16: #{tpu_custom_call.1} parent=11 // pred_fallthru
          _
      $region12: #{tpu_custom_call.1} parent=5 // pred_fallthru
        _
      %p105 = scmp.lt.s32.totalorder %s14, 2
      // Predicated region
      $region17: #{tpu_custom_call.1} parent=5 // pred_check
        %p106 = pneg %p105
      $region18: #{tpu_custom_call.1} parent=5 // pred_check_branch
        %108 = sbr.rel (%p106) target = $region20
      $region19: #{tpu_custom_call.1} parent=5 // pred_region
        // Predicated region
        $region21: #{tpu_custom_call.1} parent=19 // pred_check
          %p109 = pneg %p34
        $region22: #{tpu_custom_call.1} parent=19 // pred_check_branch
          %111 = sbr.rel (%p109) target = $region24
        $region23: #{tpu_custom_call.1} parent=19 // pred_region
          %s112 = sand.u32 %s24, 1
          %s113 = scalar_lea.sflag [#allocation3], %s112
          %s114 = sand.u32 %s24, 1
          %s115 = smul.addr %s114, 8
          %s116 = scalar_lea.vmem [#allocation2], %s115
          %s118 = ssub.s32 128, 128
          %119 = vsyncadd %s113, %s118
          %s120 = smul.addr %s14, 128
          %s121 = scalar_lea.hbm %s0, %s120
          %s123 = sshll.u32 %s116, 4
          %s124 = int_to_ptr.vmem [resolvable:$true] %s123
          %126 = dma.hbm_to_vmem [thread:$0]  %s121, 128, %s124, %s113
        $region24: #{tpu_custom_call.1} parent=19 // pred_fallthru
          _
      $region20: #{tpu_custom_call.1} parent=5 // pred_fallthru
        _
      %p127 = scmp.le.s32.totalorder 1, %s14
      %p128 = scmp.lt.s32.totalorder %s14, 3
      %p129 = pnand %p127, %p128
      %p130 = pneg %p129
      // Predicated region
      $region25: #{tpu_custom_call.1} parent=5 // pred_check
        _
      $region26: #{tpu_custom_call.1} parent=5 // pred_check_branch
        %132 = sbr.rel (%p129) target = $region28
      $region27: #{tpu_custom_call.1} parent=5 // pred_region
        %s133 = ssub.s32 %s14, 1
        %s134 = sand.u32 %s27, 1
        %s135 = scalar_lea.sflag [#allocation3], %s134
        %s136 = sand.u32 %s27, 1
        %s137 = smul.addr %s136, 8
        %s138 = scalar_lea.vmem [#allocation2], %s137
        // Predicated region
        $region29: #{tpu_custom_call.1} parent=27 // pred_check
          %p139 = pneg %p40
        $region30: #{tpu_custom_call.1} parent=27 // pred_check_branch
          %141 = sbr.rel (%p139) target = $region32
        $region31: #{tpu_custom_call.1} parent=27 // pred_region
          %142 = dma.done %s135, 128
        $region32: #{tpu_custom_call.1} parent=27 // pred_fallthru
          _
        %s143 = sand.u32 %s27, 1
        %s144 = scalar_lea.sflag [#allocation3], %s143
        %s145 = sand.u32 %s27, 1
        %s146 = smul.addr %s145, 8
        %s147 = scalar_lea.vmem [#allocation2], %s146
        %p148 = pneg %p40
        %p149 = pneg %p37
        %p150 = pneg %p61
        %p151 = pneg %p58
        %p152 = pneg %p87
        %p153 = pneg %p84
        %s154 = sand.u32 %s74, 1
        %s155 = scalar_lea.sflag [#allocation4], %s154
        %s156 = sand.u32 %s74, 1
        %s157 = smul.addr %s156, 8
        %s158 = scalar_lea.vmem [#allocation5], %s157
        %v159 = vld [vmem:[%s138] sm:$0xff]
        %v160 = vmul.f32 %v159, %v159
        %161 = vadd.xlane.f32.xlu0 %v160
        %v162 = vpop.xlane.xlu0 %161
        %v163 = vmul.f32 %v162, 0.0078125
        %v164 = vrsqrt.pop %v163
        %v165 = vmul.f32 %v163, %v164
        %vm166 = vcmp.eq.f32.partialorder %v163, inf
        %v167 = vsel %vm166, %v163, %v165
        %vm168 = vcmp.eq.f32.partialorder %v163, 0.0
        %v169 = vand.u32 %v163, 2147483648
        %v170 = vsel %vm168, %v169, %v167
        %v171 = vadd.f32 %v170, 1e-05
        %v172 = vrcp.pop %v171
        %v173 = vld [vmem:[%s1] sm:$0x1]
        %v174 = vmul.f32 %v159, %v172
        %v176 = vlaneseq
        %v177 = vshrl.u32 %v176, 7
        %v178 = vsub.s32 0, %v177
        %v179 = vrot.slane %v173, %v178
        %v181 = vmul.f32 %v174, %v179
        %182 = vst [vmem:[%s158] sm:$0xff] %v181
        %s183 = sand.u32 %s74, 1
        %s184 = scalar_lea.sflag [#allocation4], %s183
        %s185 = sand.u32 %s74, 1
        %s186 = smul.addr %s185, 8
        %s187 = scalar_lea.vmem [#allocation5], %s186
        // Predicated region
        $region33: #{tpu_custom_call.1} parent=27 // pred_check
          %p188 = pneg %p84
        $region34: #{tpu_custom_call.1} parent=27 // pred_check_branch
          %190 = sbr.rel (%p188) target = $region36
        $region35: #{tpu_custom_call.1} parent=27 // pred_region
          %s192 = ssub.s32 128, 128
          %193 = vsyncadd %s184, %s192
          %s194 = smul.addr %s19, 128
          %s195 = scalar_lea.hbm %s2, %s194
          %s197 = sshll.u32 %s187, 4
          %s198 = int_to_ptr.vmem [resolvable:$true] %s197
          %200 = dma.vmem_to_hbm [thread:$0]  %s198, 128, %s195, %s184
        $region36: #{tpu_custom_call.1} parent=27 // pred_fallthru
          _
      $region28: #{tpu_custom_call.1} parent=5 // pred_fallthru
        _
      %p201 = scmp.le.s32.totalorder 2, %s14
      // Predicated region
      $region37: #{tpu_custom_call.1} parent=5 // pred_check
        %p202 = pneg %p201
      $region38: #{tpu_custom_call.1} parent=5 // pred_check_branch
        %204 = sbr.rel (%p202) target = $region40
      $region39: #{tpu_custom_call.1} parent=5 // pred_region
        %s205 = ssub.s32 %s14, 2
        // Predicated region
        $region41: #{tpu_custom_call.1} parent=39 // pred_check
          %p206 = pneg %p90
        $region42: #{tpu_custom_call.1} parent=39 // pred_check_branch
          %208 = sbr.rel (%p206) target = $region44
        $region43: #{tpu_custom_call.1} parent=39 // pred_region
          %s209 = sand.u32 %s75, 1
          %s210 = scalar_lea.sflag [#allocation4], %s209
          %s211 = sand.u32 %s75, 1
          %s212 = smul.addr %s211, 8
          %s213 = scalar_lea.vmem [#allocation5], %s212
          %214 = dma.done %s210, 128
        $region44: #{tpu_custom_call.1} parent=39 // pred_fallthru
          _
      $region40: #{tpu_custom_call.1} parent=5 // pred_fallthru
        _
    $region6: #{tpu_custom_call.1} parent=1 // loop_footer
      %s18 = sadd.s32 1, %s14
    $region7: #{tpu_custom_call.1} parent=1 // loop_footer_branch
      %13 = sbr.rel target = $region3
    $region8: #{tpu_custom_call.1} parent=1 // loop_exit
      _
    %215 = vsyncpa [#allocation3], 1
    %s216 = scalar_lea.sflag [#allocation3], 1
    %217 = vsyncpa %s216, 1
    %218 = vsyncpa [#allocation4], 1
    %s219 = scalar_lea.sflag [#allocation4], 1
    %220 = vsyncpa %s219, 1

</llo_original>
